<compile_context>
chip_gen: v7x
topology: tpu7x:2x2x1
jax: 0.10.0
libtpu: 0.0.40
codegen_flags: <defaults>
</compile_context>

<pallas_src>
import jax
import jax.numpy as jnp
from jax import lax
from jax.experimental import pallas as pl
from jax.experimental.pallas import tpu as pltpu


def linear_gelu_kernel(x_ref, wt_ref, b_ref, o_ref):
    # x_ref: (B, IN), wt_ref: (IN, OUT) [pre-transposed at init],
    # b_ref: (1, OUT), o_ref: (B, OUT)
    x = x_ref[...]
    wt = wt_ref[...]
    b = b_ref[...]

    # y = x @ W^T + b ; transpose already folded into the stored weight layout,
    # f32 accumulation.
    y = jnp.dot(x, wt, preferred_element_type=jnp.float32) + b

    # exact GELU: 0.5 * y * (1 + erf(y / sqrt(2)))  (matches torch default)
    o_ref[...] = (0.5 * y * (1.0 + lax.erf(y * (1.0 / jnp.sqrt(2.0))))).astype(
        o_ref.dtype
    )


def init_linear_gelu_params(w, b):
    """One-time parameter layout change (done at init/load, NOT per forward):
    W (OUT, IN) -> Wt (IN, OUT); b (OUT,) -> (1, OUT)."""
    out_f = w.shape[0]
    wt = jnp.asarray(w).T          # (IN, OUT)
    b2d = jnp.asarray(b).reshape(1, out_f)
    return wt, b2d


def linear_gelu(x, wt, b2d):
    """Forward: expects parameters already in kernel layout (from init_...)."""
    B, IN = x.shape
    OUT = wt.shape[1]

    cost = pl.CostEstimate(
        flops=2 * B * IN * OUT,
        transcendentals=B * OUT,
        bytes_accessed=(B * IN + IN * OUT + OUT + B * OUT) * 4,
    )

    return pl.pallas_call(
        linear_gelu_kernel,
        out_shape=jax.ShapeDtypeStruct((B, OUT), x.dtype),
        # Gridless call: full arrays live in VMEM, no pipelining machinery.
        in_specs=[
            pl.BlockSpec(memory_space=pltpu.MemorySpace.VMEM),
            pl.BlockSpec(memory_space=pltpu.MemorySpace.VMEM),
            pl.BlockSpec(memory_space=pltpu.MemorySpace.VMEM),
        ],
        out_specs=pl.BlockSpec(memory_space=pltpu.MemorySpace.VMEM),
        cost_estimate=cost,
    )(x, wt, b2d)


if __name__ == "__main__":
    key = jax.random.PRNGKey(0)
    kx, kw, kb = jax.random.split(key, 3)

    IN_F, OUT_F = 4, 4
    B = 2

    # Deterministic parameter init (PyTorch Linear default: U(-1/sqrt(in), 1/sqrt(in)))
    bound = 1.0 / jnp.sqrt(jnp.float32(IN_F))
    w = jax.random.uniform(kw, (OUT_F, IN_F), jnp.float32, -bound, bound)
    b = jax.random.uniform(kb, (OUT_F,), jnp.float32, -bound, bound)

    # One-time layout change at init (not in the forward path).
    wt, b2d = init_linear_gelu_params(w, b)

    x = jax.random.normal(kx, (B, IN_F), jnp.float32)

    # jit the forward so the pre-laid-out params are captured and no per-call
    # transpose/reshape ops appear in the executed graph.
    fwd = jax.jit(linear_gelu)
    out = fwd(x, wt, b2d)
    jax.block_until_ready(out)

    # correctness check against pure-JAX reference (exact GELU, torch semantics)
    ref = jax.nn.gelu(x @ w.T + b, approximate=False)
    assert out.shape == (B, OUT_F)
    assert jnp.allclose(out, ref, atol=1e-5, rtol=1e-5), (out, ref)

    print("KERNEL_OK")
</pallas_src>

<mosaic_0001>
module attributes {stable_mosaic.version = 11 : i64} {
  func.func @linear_gelu_kernel(%arg0: memref<2x4xf32, #tpu.memory_space<vmem>>, %arg1: memref<4x4xf32, #tpu.memory_space<vmem>>, %arg2: memref<1x4xf32, #tpu.memory_space<vmem>>, %arg3: memref<2x4xf32, #tpu.memory_space<vmem>>) attributes {dimension_semantics = [], scalar_prefetch = 0 : i64, scratch_operands = 0 : i64, tpu.core_type = #tpu.core_type<tc>} {
    %c0 = arith.constant 0 : index
    %c0_0 = arith.constant 0 : index
    %0 = vector.load %arg0[%c0, %c0_0] : memref<2x4xf32, #tpu.memory_space<vmem>>, vector<2x4xf32>
    %c0_1 = arith.constant 0 : index
    %c0_2 = arith.constant 0 : index
    %1 = vector.load %arg1[%c0_1, %c0_2] : memref<4x4xf32, #tpu.memory_space<vmem>>, vector<4x4xf32>
    %c0_3 = arith.constant 0 : index
    %c0_4 = arith.constant 0 : index
    %2 = vector.load %arg2[%c0_3, %c0_4] : memref<1x4xf32, #tpu.memory_space<vmem>>, vector<1x4xf32>
    %cst = arith.constant dense<0.000000e+00> : vector<2x4xf32>
    %3 = tpu.matmul %0, %1, %cst {dimension_numbers = #tpu.dot_dimension_numbers<[1], [0], [0], [1], [0, 0, 1, 1], [], []>} : vector<2x4xf32>, vector<4x4xf32>, vector<2x4xf32> -> vector<2x4xf32>
    %4 = vector.broadcast %2 : vector<1x4xf32> to vector<2x4xf32>
    %5 = arith.addf %3, %4 : vector<2x4xf32>
    %cst_5 = arith.constant 5.000000e-01 : f32
    %6 = vector.broadcast %cst_5 : f32 to vector<2x4xf32>
    %7 = arith.mulf %6, %5 : vector<2x4xf32>
    %cst_6 = arith.constant 2.000000e+00 : f32
    %8 = math.sqrt %cst_6 : f32
    %cst_7 = arith.constant 1.000000e+00 : f32
    %9 = arith.divf %cst_7, %8 : f32
    %10 = vector.broadcast %9 : f32 to vector<2x4xf32>
    %11 = arith.mulf %5, %10 : vector<2x4xf32>
    %12 = math.erf %11 : vector<2x4xf32>
    %cst_8 = arith.constant 1.000000e+00 : f32
    %13 = vector.broadcast %cst_8 : f32 to vector<2x4xf32>
    %14 = arith.addf %13, %12 : vector<2x4xf32>
    %15 = arith.mulf %7, %14 : vector<2x4xf32>
    %c0_9 = arith.constant 0 : index
    %c0_10 = arith.constant 0 : index
    %16 = vector.load %arg3[%c0_9, %c0_10] : memref<2x4xf32, #tpu.memory_space<vmem>>, vector<2x4xf32>
    tpu.vector_store %arg3[%c0_9, %c0_10], %15 {strides = array<i32>} : memref<2x4xf32, #tpu.memory_space<vmem>>, vector<2x4xf32>,
    return
  }
}

</mosaic_0001>

<llo_original>
// kernel: linear_gelu.1
$region0: #{linear_gelu.1}
  #allocation0 [shape = 'u32[]', space=smem, size = 0x4, offset = 0x4, fixed_abs, tag = 'smem constant byte address 0x4 - core index']
  #allocation1 [shape = 'u32[144,128]{1,0:T(1,128)}', space=vmem, size = 0x12000, scoped, tag = 'internal scratch']
  %s0 = inlined_call_operand.hbm [shape: f32[2,4], index: 0, kind: input, shape index: {}]
  %s1 = inlined_call_operand.hbm [shape: f32[4,4], index: 1, kind: input, shape index: {}]
  %s2 = inlined_call_operand.vmem [shape: f32[1,4], index: 2, kind: input, shape index: {}]
  %s3 = inlined_call_operand.hbm [shape: f32[2,4], index: 3, kind: output, shape index: {}]
  %s4 = sld [smem:[#allocation0]]
  $region30: #{linear_gelu.1} parent=0
    _
  %s6 = ssub.s32 1, %s4
  %s7 = scalar_select 0, %s6, %s4
  $region1: #{linear_gelu.1} parent=0
    #allocation2 [shape = 'u8[1024]{0}', space=vmem, size = 0x400, scoped, tag = 'input window, operand 0, single buffered']
    #allocation3 [shape = 's32[1]{0}', space=sflag, size = 0x4, scoped, tag = 'scoped memory for linear_gelu.1']
    #allocation4 [shape = 's32[1]{0}', space=sflag, size = 0x4, scoped, tag = 'scoped memory for linear_gelu.1']
    #allocation5 [shape = 'u8[2048]{0}', space=vmem, size = 0x800, scoped, tag = 'input window, operand 1, single buffered']
    #allocation6 [shape = 's32[1]{0}', space=sflag, size = 0x4, scoped, tag = 'scoped memory for linear_gelu.1']
    #allocation7 [shape = 'u8[1024]{0}', space=vmem, size = 0x400, scoped, tag = 'output window, operand 0, single buffered']
    %8 = vsyncpa [#allocation3], 0
    %9 = vsyncpa [#allocation6], 0
    %10 = vsyncpa [#allocation4], 0
    // Predicated region
    $region2: #{linear_gelu.1} parent=1 // pred_check
      _
    $region3: #{linear_gelu.1} parent=1 // pred_check_branch
      %12 = sbr.rel (0) target = $region5
    $region4: #{linear_gelu.1} parent=1 // pred_region
      %s14 = ssub.s32 32, 32
      %15 = vsyncadd [#allocation3], %s14
      %s17 = sshll.u32 [#allocation2], 4
      %s18 = int_to_ptr.vmem [resolvable:$true] %s17
      %20 = dma.hbm_to_vmem [thread:$0]  %s0, 32, %s18, [#allocation3]
    $region5: #{linear_gelu.1} parent=1 // pred_fallthru
      _
    // Predicated region
    $region6: #{linear_gelu.1} parent=1 // pred_check
      _
    $region7: #{linear_gelu.1} parent=1 // pred_check_branch
      %22 = sbr.rel (0) target = $region9
    $region8: #{linear_gelu.1} parent=1 // pred_region
      %s24 = ssub.s32 64, 64
      %25 = vsyncadd [#allocation6], %s24
      %s27 = sshll.u32 [#allocation5], 4
      %s28 = int_to_ptr.vmem [resolvable:$true] %s27
      %30 = dma.hbm_to_vmem [thread:$0]  %s1, 64, %s28, [#allocation6]
    $region9: #{linear_gelu.1} parent=1 // pred_fallthru
      _
    // Predicated region
    $region10: #{linear_gelu.1} parent=1 // pred_check
      _
    $region11: #{linear_gelu.1} parent=1 // pred_check_branch
      %32 = sbr.rel (0) target = $region13
    $region12: #{linear_gelu.1} parent=1 // pred_region
      _
    $region13: #{linear_gelu.1} parent=1 // pred_fallthru
      _
    // Predicated region
    $region14: #{linear_gelu.1} parent=1 // pred_check
      _
    $region15: #{linear_gelu.1} parent=1 // pred_check_branch
      %34 = sbr.rel (0) target = $region17
    $region16: #{linear_gelu.1} parent=1 // pred_region
      %35 = dma.done [#allocation3], 32
    $region17: #{linear_gelu.1} parent=1 // pred_fallthru
      _
    // Predicated region
    $region18: #{linear_gelu.1} parent=1 // pred_check
      _
    $region19: #{linear_gelu.1} parent=1 // pred_check_branch
      %37 = sbr.rel (0) target = $region21
    $region20: #{linear_gelu.1} parent=1 // pred_region
      %38 = dma.done [#allocation6], 64
    $region21: #{linear_gelu.1} parent=1 // pred_fallthru
      _
    %v39 = vld [vmem:[#allocation2] sm:$0x3]
    %v40 = vld [vmem:[#allocation5] sm:$0xf]
    %v41 = vld [vmem:[%s2] sm:$0x1]
    %v43 = vlaneseq
    %v44 = vshrl.u32 %v43, 7
    %v45 = vsub.s32 0, %v44
    %v46 = vrot.slane %v41, %v45
    %vm48 = vcmask 31744
    %v50 = vsel %vm48, %v39, 0
    %vm52 = vcmask 1043456
    %v54 = vsel %vm52, %v40, 0
    %56 = vmatprep.subr.mxu0 0.0
    %57 = vmatpush1.msra.mxu0 %v54
    %58 = vmatprep.subr.mxu0 0.0
    %59 = vmatpush1.msra.mxu0 0.0
    %60 = vmatprep.subr.mxu0 0.0
    %61 = vmatpush1.msra.mxu0 0.0
    %62 = vmatprep.subr.mxu0 0.0
    %63 = vmatpush1.msra.mxu0 0.0
    %64 = vmatprep.subr.mxu0 0.0
    %65 = vmatpush1.msra.mxu0 0.0
    %66 = vmatprep.subr.mxu0 0.0
    %67 = vmatpush1.msra.mxu0 0.0
    %68 = vmatprep.subr.mxu0 0.0
    %69 = vmatpush1.msra.mxu0 0.0
    %70 = vmatprep.subr.mxu0 0.0
    %71 = vmatpush1.msra.mxu0 0.0
    %72 = vmatprep.subr.mxu0 0.0
    %73 = vmatpush1.msra.mxu0 0.0
    %74 = vmatprep.subr.mxu0 0.0
    %75 = vmatpush1.msra.mxu0 0.0
    %76 = vmatprep.subr.mxu0 0.0
    %77 = vmatpush1.msra.mxu0 0.0
    %78 = vmatprep.subr.mxu0 0.0
    %79 = vmatpush1.msra.mxu0 0.0
    %80 = vmatprep.subr.mxu0 0.0
    %81 = vmatpush1.msra.mxu0 0.0
    %82 = vmatprep.subr.mxu0 0.0
    %83 = vmatpush1.msra.mxu0 0.0
    %84 = vmatprep.subr.mxu0 0.0
    %85 = vmatpush1.msra.mxu0 0.0
    %86 = vmatprep.subr.mxu0 0.0
    %87 = vmatpush1.msra.mxu0 0.0
    %88 = vmatprep.subr.mxu0 0.0
    %89 = vmatpush1.msra.mxu0 0.0
    %90 = vmatprep.subr.mxu0 0.0
    %91 = vmatpush1.msra.mxu0 0.0
    %92 = vmatprep.subr.mxu0 0.0
    %93 = vmatpush1.msra.mxu0 0.0
    %94 = vmatprep.subr.mxu0 0.0
    %95 = vmatpush1.msra.mxu0 0.0
    %96 = vmatprep.subr.mxu0 0.0
    %97 = vmatpush1.msra.mxu0 0.0
    %98 = vmatprep.subr.mxu0 0.0
    %99 = vmatpush1.msra.mxu0 0.0
    %100 = vmatprep.subr.mxu0 0.0
    %101 = vmatpush1.msra.mxu0 0.0
    %102 = vmatprep.subr.mxu0 0.0
    %103 = vmatpush1.msra.mxu0 0.0
    %104 = vmatprep.subr.mxu0 0.0
    %105 = vmatpush1.msra.mxu0 0.0
    %106 = vmatprep.subr.mxu0 0.0
    %107 = vmatpush1.msra.mxu0 0.0
    %108 = vmatprep.subr.mxu0 0.0
    %109 = vmatpush1.msra.mxu0 0.0
    %110 = vmatprep.subr.mxu0 0.0
    %111 = vmatpush1.msra.mxu0 0.0
    %112 = vmatprep.subr.mxu0 0.0
    %113 = vmatpush1.msra.mxu0 0.0
    %114 = vmatprep.subr.mxu0 0.0
    %115 = vmatpush1.msra.mxu0 0.0
    %116 = vmatprep.subr.mxu0 0.0
    %117 = vmatpush1.msra.mxu0 0.0
    %118 = vmatprep.subr.mxu0 0.0
    %119 = vmatpush1.msra.mxu0 0.0
    %120 = vmatprep.mubr.f32.mxu0 0.0
    %121 = vmatmul.mubr.f32.gmra.mrb[0].mxu0 %v50
    %v122 = vpop.f32.mrb[0].mxu0
    %v123 = vadd.f32 %v46, %v122
    %v124 = vpop.f32.mrb[0].mxu0
    %125 = vdwg.mxu0
    %v126 = vmul.f32 %v123, 0.5
    %v127 = vmul.f32 %v123, 0.70710677
    %v128 = verf.f32.pop %v127
    %v129 = vadd.f32 %v128, 1.0
    %v130 = vmul.f32 %v126, %v129
    %vm131 = vcmask 25600
    %132 = vst.msk [vmem:[#allocation7] sm:$0x3] %vm131, %v130
    // Predicated region
    $region22: #{linear_gelu.1} parent=1 // pred_check
      _
    $region23: #{linear_gelu.1} parent=1 // pred_check_branch
      %134 = sbr.rel (0) target = $region25
    $region24: #{linear_gelu.1} parent=1 // pred_region
      %s136 = ssub.s32 32, 32
      %137 = vsyncadd [#allocation4], %s136
      %s139 = sshll.u32 [#allocation7], 4
      %s140 = int_to_ptr.vmem [resolvable:$true] %s139
      %142 = dma.vmem_to_hbm [thread:$0]  %s140, 32, %s3, [#allocation4]
    $region25: #{linear_gelu.1} parent=1 // pred_fallthru
      _
    // Predicated region
    $region26: #{linear_gelu.1} parent=1 // pred_check
      _
    $region27: #{linear_gelu.1} parent=1 // pred_check_branch
      %144 = sbr.rel (0) target = $region29
    $region28: #{linear_gelu.1} parent=1 // pred_region
      %145 = dma.done [#allocation4], 32
    $region29: #{linear_gelu.1} parent=1 // pred_fallthru
      _
    %146 = vsyncpa [#allocation3], 1
    %147 = vsyncpa [#allocation6], 1
    %148 = vsyncpa [#allocation4], 1

</llo_original>
